<compile_context>
chip_gen: v5e
topology: v5e:2x2
jax: 0.10.0
libtpu: 0.0.40
codegen_flags: <defaults>
</compile_context>

<pallas_src>
import jax
import jax.numpy as jnp
from jax import lax
from jax.experimental import pallas as pl
from jax.experimental.pallas import tpu as pltpu


# ----------------------------------------------------------------------------
# Fused forward kernel (grid=(), all operands resident in VMEM).
#   for each layer l:   h = sigmoid( sum_r (A_norm_r @ h) @ W_lr )
#   DistMult:           out[r] = (h * diag_r) @ h^T          (lane-padded cols)
# ----------------------------------------------------------------------------
def _fused_rgcn_kernel(a_ref, h_ref, w_ref, diag_ref, out_ref):
    """
    a_ref    : (R*N, N)     f32  row-stacked adjacency, rows pre-scaled by 1/max(deg,1)
    h_ref    : (N, F)       f32  input features
    w_ref    : (L, R, F, F) f32  conv weights, pre-transposed to (F_in, F_out)
    diag_ref : (R, 1, F)    f32  DistMult relation diagonals
    out_ref  : (R*N, NPAD)  f32  scores, lane-padded to NPAD (>=128) columns
    """
    n_layers, n_rel, f_in, f_out = w_ref.shape
    rn, n = a_ref.shape
    n_pad = out_ref.shape[1]

    a = a_ref[...]                                    # (R*N, N)  loaded once
    h = h_ref[...]                                    # (N, F)

    # ---- R-GCN layers (static trip counts -> fully unrolled) ----------------
    for l in range(n_layers):
        # All relations' neighbourhood aggregation in ONE MXU contraction.
        ah = jnp.dot(a, h, preferred_element_type=jnp.float32)        # (R*N, F)
        ah3 = ah.reshape(n_rel, n, f_in)          # leading-dim split (layout no-op)
        # Batched per-relation weight matmul: (R,N,F) x (R,F,F) -> (R,N,F).
        yr = lax.dot_general(ah3, w_ref[l],
                             (((2,), (1,)), ((0,), (0,))),
                             preferred_element_type=jnp.float32)
        # Cheap relation reduction (unrolled 2-D adds on the VPU).
        y = yr[0]
        for r in range(1, n_rel):
            y = y + yr[r]
        h = jax.nn.sigmoid(y)                                          # (N, F)  EUP

    # ---- DistMult decoder (diagonal relation matrices) -----------------------
    # Relation-stacked, diag-scaled activations: rows r*N..(r+1)*N-1 = h * diag_r.
    hm = jnp.concatenate([h * diag_ref[r] for r in range(n_rel)], axis=0)  # (R*N, F)

    # Zero-pad h rows to NPAD so the single decoder matmul writes a lane-dense
    # (R*N, NPAD) slab (unmasked vst, wide writeback DMA).
    if n_pad > n:
        h_rhs = jnp.concatenate(
            [h, jnp.zeros((n_pad - n, h.shape[1]), jnp.float32)], axis=0)  # (NPAD, F)
    else:
        h_rhs = h

    # hm @ h^T without an explicit transpose: contract last dims of both operands.
    out_ref[...] = lax.dot_general(
        hm, h_rhs, (((1,), (1,)), ((), ())),
        preferred_element_type=jnp.float32).astype(out_ref.dtype)           # (R*N, NPAD)


# ----------------------------------------------------------------------------
# Wrapper: hoist static preprocessing out of the kernel, then one pallas_call.
# ----------------------------------------------------------------------------
def basic_rgcn_forward(adj, feats, conv_weights, rel_matrices):
    R, N, _ = adj.shape
    F = feats.shape[1]
    L = len(conv_weights)
    n_pad = max(128, ((N + 127) // 128) * 128)   # lane-dense output width

    # Fold the degree normalisation into A once (graph is static across layers):
    #   inv * ((A @ H) @ W^T) == ((inv * A) @ H) @ W^T   (row scaling commutes).
    deg = jnp.sum((adj != 0.0).astype(jnp.float32), axis=2, keepdims=True)  # (R,N,1)
    deg = jnp.where(deg == 0.0, 1.0, deg)
    a_norm = (adj * (1.0 / deg)).astype(jnp.float32).reshape(R * N, N)      # row-stacked

    # Pre-transpose conv weights (R, F_out, F_in) -> (R, F_in, F_out); stack layers.
    w = jnp.stack([jnp.swapaxes(wl, 1, 2) for wl in conv_weights]).astype(jnp.float32)

    # DistMult relation matrices are diagonal (torch.diag in __init__):
    # keep only the diagonal -> elementwise scale in the kernel.
    diag = jnp.diagonal(rel_matrices, axis1=1, axis2=2)[:, None, :].astype(jnp.float32)

    def vmem_spec():
        return pl.BlockSpec(memory_space=pltpu.MemorySpace.VMEM)

    flops = L * (2 * R * N * N * F + 2 * R * N * F * F) + 2 * R * N * F * n_pad
    bytes_accessed = 4 * (R * N * N + N * F + L * R * F * F + R * F + R * N * n_pad)
    cost = pl.CostEstimate(flops=flops, transcendentals=L * N * F,
                           bytes_accessed=bytes_accessed)

    out = pl.pallas_call(
        _fused_rgcn_kernel,
        out_shape=jax.ShapeDtypeStruct((R * N, n_pad), jnp.float32),
        in_specs=[vmem_spec(), vmem_spec(), vmem_spec(), vmem_spec()],
        out_specs=vmem_spec(),
        cost_estimate=cost,
    )(a_norm, feats.astype(jnp.float32), w, diag)

    return out.reshape(R, N, n_pad)[:, :, :N]


# ----------------------------------------------------------------------------
# Pure-JAX reference (mirrors the PyTorch forward) for a sanity check.
# ----------------------------------------------------------------------------
def reference_forward(adj, feats, conv_weights, rel_matrices):
    h = feats
    for w in conv_weights:
        y = jnp.zeros((h.shape[0], w.shape[1]), jnp.float32)
        for r in range(adj.shape[0]):
            cnt = jnp.sum(adj[r] != 0.0, axis=1).astype(jnp.float32)
            cnt = jnp.where(cnt == 0.0, 1.0, cnt)
            inv = (1.0 / cnt)[:, None]
            y = y + inv * ((adj[r] @ h) @ w[r].T)
        h = jax.nn.sigmoid(y)
    res = jnp.stack([(h @ rel_matrices[r]) @ h.T
                     for r in range(rel_matrices.shape[0])])
    return res


if __name__ == "__main__":
    key = jax.random.PRNGKey(0)
    k_adj, k_feat, k_w0, k_w1, k_diag = jax.random.split(key, 5)

    # Small, module-consistent shapes.
    N = 16            # entities
    F = 32            # in_features == out_features (required for stacking layers)
    R = 3             # relations
    LAYERS = 2

    # Graph: random sparse-ish binary adjacency per relation, random features.
    adj = (jax.random.uniform(k_adj, (R, N, N)) < 0.25).astype(jnp.float32)
    feats = jax.random.normal(k_feat, (N, F), dtype=jnp.float32)

    # Parameters (deterministic init mirroring the module's __init__ shapes).
    conv_weights = [
        jax.random.normal(k_w0, (R, F, F), dtype=jnp.float32),
        jax.random.normal(k_w1, (R, F, F), dtype=jnp.float32),
    ][:LAYERS]
    # DistMult: relations_matrices[i] = diag(rand(F))
    diag_vals = jax.random.uniform(k_diag, (R, F), dtype=jnp.float32)
    rel_matrices = jax.vmap(jnp.diag)(diag_vals)

    out = basic_rgcn_forward(adj, feats, conv_weights, rel_matrices)
    out = jax.block_until_ready(out)

    ref = reference_forward(adj, feats, conv_weights, rel_matrices)
    assert out.shape == (R, N, N)
    # Tolerance accounts for folding 1/deg into A before the matmuls and the
    # reordered relation summation (fp associativity differs from the reference).
    assert jnp.allclose(out, ref, atol=1e-3, rtol=1e-3), "mismatch vs reference"

    print("KERNEL_OK")
</pallas_src>

<mosaic_0001>
module attributes {stable_mosaic.version = 11 : i64} {
  func.func @_fused_rgcn_kernel(%arg0: memref<48x16xf32, #tpu.memory_space<vmem>>, %arg1: memref<16x32xf32, #tpu.memory_space<vmem>>, %arg2: memref<2x3x32x32xf32, #tpu.memory_space<vmem>>, %arg3: memref<3x1x32xf32, #tpu.memory_space<vmem>>, %arg4: memref<48x128xf32, #tpu.memory_space<vmem>>) attributes {dimension_semantics = [], scalar_prefetch = 0 : i64, scratch_operands = 0 : i64, tpu.core_type = #tpu.core_type<tc>} {
    %c0 = arith.constant 0 : index
    %c0_0 = arith.constant 0 : index
    %0 = vector.load %arg0[%c0, %c0_0] : memref<48x16xf32, #tpu.memory_space<vmem>>, vector<48x16xf32>
    %c0_1 = arith.constant 0 : index
    %c0_2 = arith.constant 0 : index
    %1 = vector.load %arg1[%c0_1, %c0_2] : memref<16x32xf32, #tpu.memory_space<vmem>>, vector<16x32xf32>
    %cst = arith.constant dense<0.000000e+00> : vector<48x32xf32>
    %2 = tpu.matmul %0, %1, %cst {dimension_numbers = #tpu.dot_dimension_numbers<[1], [0], [0], [1], [0, 0, 1, 1], [], []>} : vector<48x16xf32>, vector<16x32xf32>, vector<48x32xf32> -> vector<48x32xf32>
    %3 = vector.shape_cast %2 : vector<48x32xf32> to vector<3x16x32xf32>
    %c0_3 = arith.constant 0 : index
    %c0_4 = arith.constant 0 : index
    %c0_5 = arith.constant 0 : index
    %c0_6 = arith.constant 0 : index
    %4 = vector.load %arg2[%c0_3, %c0_4, %c0_5, %c0_6] : memref<2x3x32x32xf32, #tpu.memory_space<vmem>>, vector<1x3x32x32xf32>
    %5 = vector.shape_cast %4 : vector<1x3x32x32xf32> to vector<3x32x32xf32>
    %cst_7 = arith.constant dense<0.000000e+00> : vector<3x16x32xf32>
    %6 = tpu.matmul %3, %5, %cst_7 {dimension_numbers = #tpu.dot_dimension_numbers<[2], [1], [1], [2], [0, 0, 0, 1, 1, 2], [0], [0]>} : vector<3x16x32xf32>, vector<3x32x32xf32>, vector<3x16x32xf32> -> vector<3x16x32xf32>
    %7 = vector.extract_strided_slice %6 {offsets = [0, 0, 0], sizes = [1, 16, 32], strides = [1, 1, 1]} : vector<3x16x32xf32> to vector<1x16x32xf32>
    %8 = vector.shape_cast %7 : vector<1x16x32xf32> to vector<16x32xf32>
    %9 = vector.extract_strided_slice %6 {offsets = [1, 0, 0], sizes = [1, 16, 32], strides = [1, 1, 1]} : vector<3x16x32xf32> to vector<1x16x32xf32>
    %10 = vector.shape_cast %9 : vector<1x16x32xf32> to vector<16x32xf32>
    %11 = arith.addf %8, %10 : vector<16x32xf32>
    %12 = vector.extract_strided_slice %6 {offsets = [2, 0, 0], sizes = [1, 16, 32], strides = [1, 1, 1]} : vector<3x16x32xf32> to vector<1x16x32xf32>
    %13 = vector.shape_cast %12 : vector<1x16x32xf32> to vector<16x32xf32>
    %14 = arith.addf %11, %13 : vector<16x32xf32>
    %15 = arith.negf %14 : vector<16x32xf32>
    %16 = math.exp %15 : vector<16x32xf32>
    %cst_8 = arith.constant 1.000000e+00 : f32
    %17 = vector.broadcast %cst_8 : f32 to vector<16x32xf32>
    %18 = arith.addf %17, %16 : vector<16x32xf32>
    %19 = arith.divf %17, %18 : vector<16x32xf32>
    %cst_9 = arith.constant dense<0.000000e+00> : vector<48x32xf32>
    %20 = tpu.matmul %0, %19, %cst_9 {dimension_numbers = #tpu.dot_dimension_numbers<[1], [0], [0], [1], [0, 0, 1, 1], [], []>} : vector<48x16xf32>, vector<16x32xf32>, vector<48x32xf32> -> vector<48x32xf32>
    %21 = vector.shape_cast %20 : vector<48x32xf32> to vector<3x16x32xf32>
    %c1 = arith.constant 1 : index
    %c0_10 = arith.constant 0 : index
    %c0_11 = arith.constant 0 : index
    %c0_12 = arith.constant 0 : index
    %22 = vector.load %arg2[%c1, %c0_10, %c0_11, %c0_12] : memref<2x3x32x32xf32, #tpu.memory_space<vmem>>, vector<1x3x32x32xf32>
    %23 = vector.shape_cast %22 : vector<1x3x32x32xf32> to vector<3x32x32xf32>
    %cst_13 = arith.constant dense<0.000000e+00> : vector<3x16x32xf32>
    %24 = tpu.matmul %21, %23, %cst_13 {dimension_numbers = #tpu.dot_dimension_numbers<[2], [1], [1], [2], [0, 0, 0, 1, 1, 2], [0], [0]>} : vector<3x16x32xf32>, vector<3x32x32xf32>, vector<3x16x32xf32> -> vector<3x16x32xf32>
    %25 = vector.extract_strided_slice %24 {offsets = [0, 0, 0], sizes = [1, 16, 32], strides = [1, 1, 1]} : vector<3x16x32xf32> to vector<1x16x32xf32>
    %26 = vector.shape_cast %25 : vector<1x16x32xf32> to vector<16x32xf32>
    %27 = vector.extract_strided_slice %24 {offsets = [1, 0, 0], sizes = [1, 16, 32], strides = [1, 1, 1]} : vector<3x16x32xf32> to vector<1x16x32xf32>
    %28 = vector.shape_cast %27 : vector<1x16x32xf32> to vector<16x32xf32>
    %29 = arith.addf %26, %28 : vector<16x32xf32>
    %30 = vector.extract_strided_slice %24 {offsets = [2, 0, 0], sizes = [1, 16, 32], strides = [1, 1, 1]} : vector<3x16x32xf32> to vector<1x16x32xf32>
    %31 = vector.shape_cast %30 : vector<1x16x32xf32> to vector<16x32xf32>
    %32 = arith.addf %29, %31 : vector<16x32xf32>
    %33 = arith.negf %32 : vector<16x32xf32>
    %34 = math.exp %33 : vector<16x32xf32>
    %cst_14 = arith.constant 1.000000e+00 : f32
    %35 = vector.broadcast %cst_14 : f32 to vector<16x32xf32>
    %36 = arith.addf %35, %34 : vector<16x32xf32>
    %37 = arith.divf %35, %36 : vector<16x32xf32>
    %c0_15 = arith.constant 0 : index
    %c0_16 = arith.constant 0 : index
    %c0_17 = arith.constant 0 : index
    %38 = vector.load %arg3[%c0_15, %c0_16, %c0_17] : memref<3x1x32xf32, #tpu.memory_space<vmem>>, vector<1x1x32xf32>
    %39 = vector.shape_cast %38 : vector<1x1x32xf32> to vector<1x32xf32>
    %40 = vector.broadcast %39 : vector<1x32xf32> to vector<16x32xf32>
    %41 = arith.mulf %37, %40 : vector<16x32xf32>
    %c1_18 = arith.constant 1 : index
    %c0_19 = arith.constant 0 : index
    %c0_20 = arith.constant 0 : index
    %42 = vector.load %arg3[%c1_18, %c0_19, %c0_20] : memref<3x1x32xf32, #tpu.memory_space<vmem>>, vector<1x1x32xf32>
    %43 = vector.shape_cast %42 : vector<1x1x32xf32> to vector<1x32xf32>
    %44 = vector.broadcast %43 : vector<1x32xf32> to vector<16x32xf32>
    %45 = arith.mulf %37, %44 : vector<16x32xf32>
    %c2 = arith.constant 2 : index
    %c0_21 = arith.constant 0 : index
    %c0_22 = arith.constant 0 : index
    %46 = vector.load %arg3[%c2, %c0_21, %c0_22] : memref<3x1x32xf32, #tpu.memory_space<vmem>>, vector<1x1x32xf32>
    %47 = vector.shape_cast %46 : vector<1x1x32xf32> to vector<1x32xf32>
    %48 = vector.broadcast %47 : vector<1x32xf32> to vector<16x32xf32>
    %49 = arith.mulf %37, %48 : vector<16x32xf32>
    %50 = tpu.concatenate %41, %45, %49 in 0 : vector<16x32xf32>, vector<16x32xf32>, vector<16x32xf32> -> vector<48x32xf32>
    %cst_23 = arith.constant 0.000000e+00 : f32
    %51 = vector.broadcast %cst_23 : f32 to vector<112x32xf32>
    %52 = tpu.concatenate %37, %51 in 0 : vector<16x32xf32>, vector<112x32xf32> -> vector<128x32xf32>
    %cst_24 = arith.constant dense<0.000000e+00> : vector<48x128xf32>
    %53 = tpu.matmul %50, %52, %cst_24 {dimension_numbers = #tpu.dot_dimension_numbers<[1], [1], [0], [0], [0, 0, 1, 0], [], []>} : vector<48x32xf32>, vector<128x32xf32>, vector<48x128xf32> -> vector<48x128xf32>
    %c0_25 = arith.constant 0 : index
    %c0_26 = arith.constant 0 : index
    %54 = vector.load %arg4[%c0_25, %c0_26] : memref<48x128xf32, #tpu.memory_space<vmem>>, vector<48x128xf32>
    tpu.vector_store %arg4[%c0_25, %c0_26], %53 {strides = array<i32>} : memref<48x128xf32, #tpu.memory_space<vmem>>, vector<48x128xf32>,
    return
  }
}

</mosaic_0001>

<llo_original>
// kernel: tpu_custom_call.1
$region0: #{tpu_custom_call.1}
  #allocation0 [shape = 'u32[]', space=smem, size = 0x4, offset = 0x4, fixed_abs, tag = 'smem constant byte address 0x4 - core index']
  #allocation1 [shape = 'u32[72,128]{1,0:T(1,128)}', space=vmem, size = 0x9000, scoped, tag = 'internal scratch']
  %s0 = inlined_call_operand.vmem [shape: f32[48,16], index: 0, kind: input, shape index: {}]
  %s1 = inlined_call_operand.vmem [shape: f32[16,32], index: 1, kind: input, shape index: {}]
  %s2 = inlined_call_operand.hbm [shape: f32[2,3,32,32], index: 2, kind: input, shape index: {}]
  %s3 = inlined_call_operand.vmem [shape: f32[3,1,32], index: 3, kind: input, shape index: {}]
  %s4 = inlined_call_operand.hbm [shape: f32[48,128], index: 4, kind: output, shape index: {}]
  %s5 = sld [smem:[#allocation0]]
  $region30: #{tpu_custom_call.1} parent=0
    _
  %s7 = ssub.s32 1, %s5
  %s8 = scalar_select 0, %s7, %s5
  $region1: #{tpu_custom_call.1} parent=0
    #allocation2 [shape = 'u8[98304]{0}', space=vmem, size = 0x18000, scoped, tag = 'input window, operand 2, single buffered']
    #allocation3 [shape = 's32[1]{0}', space=sflag, size = 0x4, scoped, tag = 'scoped memory for tpu_custom_call.1']
    #allocation4 [shape = 's32[1]{0}', space=sflag, size = 0x4, scoped, tag = 'scoped memory for tpu_custom_call.1']
    #allocation5 [shape = 'u8[24576]{0}', space=vmem, size = 0x6000, scoped, tag = 'output window, operand 0, single buffered']
    %9 = vsyncpa [#allocation3], 0
    %10 = vsyncpa [#allocation4], 0
    // Predicated region
    $region2: #{tpu_custom_call.1} parent=1 // pred_check
      _
    $region3: #{tpu_custom_call.1} parent=1 // pred_check_branch
      %12 = sbr.rel (0) target = $region5
    $region4: #{tpu_custom_call.1} parent=1 // pred_region
      _
    $region5: #{tpu_custom_call.1} parent=1 // pred_fallthru
      _
    // Predicated region
    $region6: #{tpu_custom_call.1} parent=1 // pred_check
      _
    $region7: #{tpu_custom_call.1} parent=1 // pred_check_branch
      %14 = sbr.rel (0) target = $region9
    $region8: #{tpu_custom_call.1} parent=1 // pred_region
      _
    $region9: #{tpu_custom_call.1} parent=1 // pred_fallthru
      _
    // Predicated region
    $region10: #{tpu_custom_call.1} parent=1 // pred_check
      _
    $region11: #{tpu_custom_call.1} parent=1 // pred_check_branch
      %16 = sbr.rel (0) target = $region13
    $region12: #{tpu_custom_call.1} parent=1 // pred_region
      %18 = vsyncadd [#allocation3], 0
      %s19 = sshll.u32 %s2, 4
      %s20 = int_to_ptr.hbm [resolvable:$true] %s19
      %s21 = sshll.u32 [#allocation2], 4
      %s22 = int_to_ptr.vmem [resolvable:$true] %s21
      %27 = dma.hbm_to_vmem [thread:$0]  %s20, 3072, %s22, [#allocation3], 128, 128, 8
    $region13: #{tpu_custom_call.1} parent=1 // pred_fallthru
      _
    // Predicated region
    $region14: #{tpu_custom_call.1} parent=1 // pred_check
      _
    $region15: #{tpu_custom_call.1} parent=1 // pred_check_branch
      %29 = sbr.rel (0) target = $region17
    $region16: #{tpu_custom_call.1} parent=1 // pred_region
      _
    $region17: #{tpu_custom_call.1} parent=1 // pred_fallthru
      _
    // Predicated region
    $region18: #{tpu_custom_call.1} parent=1 // pred_check
      _
    $region19: #{tpu_custom_call.1} parent=1 // pred_check_branch
      %31 = sbr.rel (0) target = $region21
    $region20: #{tpu_custom_call.1} parent=1 // pred_region
      %33 = dma.done [#allocation3], 3072
    $region21: #{tpu_custom_call.1} parent=1 // pred_fallthru
      _
    %v34 = vld [vmem:[%s0] sm:$0xff]
    %v35 = vld [vmem:[%s0 + $0x8] sm:$0xff]
    %v36 = vld [vmem:[%s0 + $0x10] sm:$0xff]
    %v37 = vld [vmem:[%s0 + $0x18] sm:$0xff]
    %v38 = vld [vmem:[%s0 + $0x20] sm:$0xff]
    %v39 = vld [vmem:[%s0 + $0x28] sm:$0xff]
    %v40 = vld [vmem:[%s1] sm:$0xff]
    %v41 = vld [vmem:[%s1 + $0x8] sm:$0xff]
    %vm42 = vcmask 130048
    %v44 = vsel %vm42, %v34, 0
    %v47 = vsel %vm42, %v35, 0
    %v50 = vsel %vm42, %v36, 0
    %v53 = vsel %vm42, %v37, 0
    %v56 = vsel %vm42, %v38, 0
    %v59 = vsel %vm42, %v39, 0
    %61 = vmatpush.msra.mxu0 0.0
    %62 = vmatpush.msra.mxu0 0.0
    %63 = vmatpush.msra.mxu0 0.0
    %64 = vmatpush.msra.mxu0 0.0
    %65 = vmatpush.msra.mxu0 0.0
    %66 = vmatpush.msra.mxu0 0.0
    %67 = vmatpush.msra.mxu0 0.0
    %68 = vmatpush.msra.mxu0 0.0
    %69 = vmatpush.msra.mxu0 0.0
    %70 = vmatpush.msra.mxu0 0.0
    %71 = vmatpush.msra.mxu0 0.0
    %72 = vmatpush.msra.mxu0 0.0
    %73 = vmatpush.msra.mxu0 0.0
    %74 = vmatpush.msra.mxu0 0.0
    %75 = vmatpush.msra.mxu0 %v41
    %76 = vmatpush.msra.mxu0 %v40
    %77 = vmatmul.f32.gmra.mxu0 %v44
    %v78 = vpop.f32.mrf.mxu0
    %v79 = vadd.f32 0.0, %v78
    %80 = vmatmul.f32.gmra.mxu0 %v47
    %v81 = vpop.f32.mrf.mxu0
    %v82 = vadd.f32 0.0, %v81
    %83 = vmatmul.f32.gmra.mxu0 %v50
    %v84 = vpop.f32.mrf.mxu0
    %v85 = vadd.f32 0.0, %v84
    %86 = vmatmul.f32.gmra.mxu0 %v53
    %v87 = vpop.f32.mrf.mxu0
    %v88 = vadd.f32 0.0, %v87
    %89 = vmatmul.f32.gmra.mxu0 %v56
    %v90 = vpop.f32.mrf.mxu0
    %v91 = vadd.f32 0.0, %v90
    %92 = vmatmul.f32.gmra.mxu0 %v59
    %v93 = vpop.f32.mrf.mxu0
    %v94 = vadd.f32 0.0, %v93
    %95 = vdwg.mxu0
    %v96 = vld [vmem:[#allocation2] sm:$0xff]
    %v97 = vld [vmem:[#allocation2 + $0x8] sm:$0xff]
    %v98 = vld [vmem:[#allocation2 + $0x10] sm:$0xff]
    %v99 = vld [vmem:[#allocation2 + $0x18] sm:$0xff]
    %v100 = vld [vmem:[#allocation2 + $0x20] sm:$0xff]
    %v101 = vld [vmem:[#allocation2 + $0x28] sm:$0xff]
    %v102 = vld [vmem:[#allocation2 + $0x30] sm:$0xff]
    %v103 = vld [vmem:[#allocation2 + $0x38] sm:$0xff]
    %v104 = vld [vmem:[#allocation2 + $0x40] sm:$0xff]
    %v105 = vld [vmem:[#allocation2 + $0x48] sm:$0xff]
    %v106 = vld [vmem:[#allocation2 + $0x50] sm:$0xff]
    %v107 = vld [vmem:[#allocation2 + $0x58] sm:$0xff]
    %vm108 = vcmask 261120
    %v110 = vsel %vm108, %v79, 0
    %v113 = vsel %vm108, %v82, 0
    %115 = vmatpush.msra.mxu0 0.0
    %116 = vmatpush.msra.mxu0 0.0
    %117 = vmatpush.msra.mxu0 0.0
    %118 = vmatpush.msra.mxu0 0.0
    %119 = vmatpush.msra.mxu0 0.0
    %120 = vmatpush.msra.mxu0 0.0
    %121 = vmatpush.msra.mxu0 0.0
    %122 = vmatpush.msra.mxu0 0.0
    %123 = vmatpush.msra.mxu0 0.0
    %124 = vmatpush.msra.mxu0 0.0
    %125 = vmatpush.msra.mxu0 0.0
    %126 = vmatpush.msra.mxu0 0.0
    %127 = vmatpush.msra.mxu0 %v99
    %128 = vmatpush.msra.mxu0 %v98
    %129 = vmatpush.msra.mxu0 %v97
    %130 = vmatpush.msra.mxu0 %v96
    %131 = vmatmul.f32.gmra.mxu0 %v110
    %v132 = vpop.f32.mrf.mxu0
    %v133 = vadd.f32 0.0, %v132
    %134 = vmatmul.f32.gmra.mxu0 %v113
    %v135 = vpop.f32.mrf.mxu0
    %v136 = vadd.f32 0.0, %v135
    %137 = vdwg.mxu0
    %v139 = vsel %vm108, %v85, 0
    %v142 = vsel %vm108, %v88, 0
    %144 = vmatpush.msra.mxu0 0.0
    %145 = vmatpush.msra.mxu0 0.0
    %146 = vmatpush.msra.mxu0 0.0
    %147 = vmatpush.msra.mxu0 0.0
    %148 = vmatpush.msra.mxu0 0.0
    %149 = vmatpush.msra.mxu0 0.0
    %150 = vmatpush.msra.mxu0 0.0
    %151 = vmatpush.msra.mxu0 0.0
    %152 = vmatpush.msra.mxu0 0.0
    %153 = vmatpush.msra.mxu0 0.0
    %154 = vmatpush.msra.mxu0 0.0
    %155 = vmatpush.msra.mxu0 0.0
    %156 = vmatpush.msra.mxu0 %v103
    %157 = vmatpush.msra.mxu0 %v102
    %158 = vmatpush.msra.mxu0 %v101
    %159 = vmatpush.msra.mxu0 %v100
    %160 = vmatmul.f32.gmra.mxu0 %v139
    %v161 = vpop.f32.mrf.mxu0
    %v162 = vadd.f32 0.0, %v161
    %163 = vmatmul.f32.gmra.mxu0 %v142
    %v164 = vpop.f32.mrf.mxu0
    %v165 = vadd.f32 0.0, %v164
    %166 = vdwg.mxu0
    %v168 = vsel %vm108, %v91, 0
    %v171 = vsel %vm108, %v94, 0
    %173 = vmatpush.msra.mxu0 0.0
    %174 = vmatpush.msra.mxu0 0.0
    %175 = vmatpush.msra.mxu0 0.0
    %176 = vmatpush.msra.mxu0 0.0
    %177 = vmatpush.msra.mxu0 0.0
    %178 = vmatpush.msra.mxu0 0.0
    %179 = vmatpush.msra.mxu0 0.0
    %180 = vmatpush.msra.mxu0 0.0
    %181 = vmatpush.msra.mxu0 0.0
    %182 = vmatpush.msra.mxu0 0.0
    %183 = vmatpush.msra.mxu0 0.0
    %184 = vmatpush.msra.mxu0 0.0
    %185 = vmatpush.msra.mxu0 %v107
    %186 = vmatpush.msra.mxu0 %v106
    %187 = vmatpush.msra.mxu0 %v105
    %188 = vmatpush.msra.mxu0 %v104
    %189 = vmatmul.f32.gmra.mxu0 %v168
    %v190 = vpop.f32.mrf.mxu0
    %v191 = vadd.f32 0.0, %v190
    %192 = vmatmul.f32.gmra.mxu0 %v171
    %v193 = vpop.f32.mrf.mxu0
    %v194 = vadd.f32 0.0, %v193
    %195 = vdwg.mxu0
    %v196 = vadd.f32 %v133, %v162
    %v197 = vadd.f32 %v136, %v165
    %v198 = vadd.f32 %v196, %v191
    %v199 = vadd.f32 %v197, %v194
    %v200 = vxor.u32 %v198, 2147483648
    %v201 = vxor.u32 %v199, 2147483648
    %v202 = vmul.f32 %v200, 1.442695
    %v203 = vpow.pop %v202
    %v204 = vmul.f32 %v201, 1.442695
    %v205 = vpow.pop %v204
    %v206 = vadd.f32 %v203, 1.0
    %v207 = vadd.f32 %v205, 1.0
    %v208 = vrcp.pop %v206
    %v209 = vmul.f32 %v206, %v208
    %v210 = vsub.f32 1.0, %v209
    %v211 = vmul.f32 %v208, %v210
    %v212 = vadd.f32 %v208, %v211
    %vm213 = vweird.f32 %v206
    %vm214 = vweird.f32 %v208
    %vm215 = vmor %vm213, %vm214
    %v216 = vsel %vm215, %v208, %v212
    %v217 = vand.u32 2147483647, %v206
    %vm218 = vcmp.eq.f32.partialorder %v217, 8.507059e+37
    %v219 = vand.u32 %v206, 2147483648
    %v220 = vor.u32 1.1754944e-38, %v219
    %v221 = vsel %vm218, %v220, %v216
    %v222 = vmul.f32 1.0, %v221
    %v223 = vrcp.pop %v207
    %v224 = vmul.f32 %v207, %v223
    %v225 = vsub.f32 1.0, %v224
    %v226 = vmul.f32 %v223, %v225
    %v227 = vadd.f32 %v223, %v226
    %vm228 = vweird.f32 %v207
    %vm229 = vweird.f32 %v223
    %vm230 = vmor %vm228, %vm229
    %v231 = vsel %vm230, %v223, %v227
    %v232 = vand.u32 2147483647, %v207
    %vm233 = vcmp.eq.f32.partialorder %v232, 8.507059e+37
    %v234 = vand.u32 %v207, 2147483648
    %v235 = vor.u32 1.1754944e-38, %v234
    %v236 = vsel %vm233, %v235, %v231
    %v237 = vmul.f32 1.0, %v236
    %238 = vmatpush.msra.mxu0 0.0
    %239 = vmatpush.msra.mxu0 0.0
    %240 = vmatpush.msra.mxu0 0.0
    %241 = vmatpush.msra.mxu0 0.0
    %242 = vmatpush.msra.mxu0 0.0
    %243 = vmatpush.msra.mxu0 0.0
    %244 = vmatpush.msra.mxu0 0.0
    %245 = vmatpush.msra.mxu0 0.0
    %246 = vmatpush.msra.mxu0 0.0
    %247 = vmatpush.msra.mxu0 0.0
    %248 = vmatpush.msra.mxu0 0.0
    %249 = vmatpush.msra.mxu0 0.0
    %250 = vmatpush.msra.mxu0 0.0
    %251 = vmatpush.msra.mxu0 0.0
    %252 = vmatpush.msra.mxu0 %v237
    %253 = vmatpush.msra.mxu0 %v222
    %254 = vmatmul.f32.gmra.mxu0 %v44
    %v255 = vpop.f32.mrf.mxu0
    %v256 = vadd.f32 0.0, %v255
    %257 = vmatmul.f32.gmra.mxu0 %v47
    %v258 = vpop.f32.mrf.mxu0
    %v259 = vadd.f32 0.0, %v258
    %260 = vmatmul.f32.gmra.mxu0 %v50
    %v261 = vpop.f32.mrf.mxu0
    %v262 = vadd.f32 0.0, %v261
    %263 = vmatmul.f32.gmra.mxu0 %v53
    %v264 = vpop.f32.mrf.mxu0
    %v265 = vadd.f32 0.0, %v264
    %266 = vmatmul.f32.gmra.mxu0 %v56
    %v267 = vpop.f32.mrf.mxu0
    %v268 = vadd.f32 0.0, %v267
    %269 = vmatmul.f32.gmra.mxu0 %v59
    %v270 = vpop.f32.mrf.mxu0
    %v271 = vadd.f32 0.0, %v270
    %272 = vdwg.mxu0
    %s273 = scalar_lea.vmem [#allocation2], 96
    %v274 = vld [vmem:[%s273] sm:$0xff]
    %v275 = vld [vmem:[%s273 + $0x8] sm:$0xff]
    %v276 = vld [vmem:[%s273 + $0x10] sm:$0xff]
    %v277 = vld [vmem:[%s273 + $0x18] sm:$0xff]
    %v278 = vld [vmem:[%s273 + $0x20] sm:$0xff]
    %v279 = vld [vmem:[%s273 + $0x28] sm:$0xff]
    %v280 = vld [vmem:[%s273 + $0x30] sm:$0xff]
    %v281 = vld [vmem:[%s273 + $0x38] sm:$0xff]
    %v282 = vld [vmem:[%s273 + $0x40] sm:$0xff]
    %v283 = vld [vmem:[%s273 + $0x48] sm:$0xff]
    %v284 = vld [vmem:[%s273 + $0x50] sm:$0xff]
    %v285 = vld [vmem:[%s273 + $0x58] sm:$0xff]
    %v287 = vsel %vm108, %v256, 0
    %v290 = vsel %vm108, %v259, 0
    %292 = vmatpush.msra.mxu0 0.0
    %293 = vmatpush.msra.mxu0 0.0
    %294 = vmatpush.msra.mxu0 0.0
    %295 = vmatpush.msra.mxu0 0.0
    %296 = vmatpush.msra.mxu0 0.0
    %297 = vmatpush.msra.mxu0 0.0
    %298 = vmatpush.msra.mxu0 0.0
    %299 = vmatpush.msra.mxu0 0.0
    %300 = vmatpush.msra.mxu0 0.0
    %301 = vmatpush.msra.mxu0 0.0
    %302 = vmatpush.msra.mxu0 0.0
    %303 = vmatpush.msra.mxu0 0.0
    %304 = vmatpush.msra.mxu0 %v277
    %305 = vmatpush.msra.mxu0 %v276
    %306 = vmatpush.msra.mxu0 %v275
    %307 = vmatpush.msra.mxu0 %v274
    %308 = vmatmul.f32.gmra.mxu0 %v287
    %v309 = vpop.f32.mrf.mxu0
    %v310 = vadd.f32 0.0, %v309
    %311 = vmatmul.f32.gmra.mxu0 %v290
    %v312 = vpop.f32.mrf.mxu0
    %v313 = vadd.f32 0.0, %v312
    %314 = vdwg.mxu0
    %v316 = vsel %vm108, %v262, 0
    %v319 = vsel %vm108, %v265, 0
    %321 = vmatpush.msra.mxu0 0.0
    %322 = vmatpush.msra.mxu0 0.0
    %323 = vmatpush.msra.mxu0 0.0
    %324 = vmatpush.msra.mxu0 0.0
    %325 = vmatpush.msra.mxu0 0.0
    %326 = vmatpush.msra.mxu0 0.0
    %327 = vmatpush.msra.mxu0 0.0
    %328 = vmatpush.msra.mxu0 0.0
    %329 = vmatpush.msra.mxu0 0.0
    %330 = vmatpush.msra.mxu0 0.0
    %331 = vmatpush.msra.mxu0 0.0
    %332 = vmatpush.msra.mxu0 0.0
    %333 = vmatpush.msra.mxu0 %v281
    %334 = vmatpush.msra.mxu0 %v280
    %335 = vmatpush.msra.mxu0 %v279
    %336 = vmatpush.msra.mxu0 %v278
    %337 = vmatmul.f32.gmra.mxu0 %v316
    %v338 = vpop.f32.mrf.mxu0
    %v339 = vadd.f32 0.0, %v338
    %340 = vmatmul.f32.gmra.mxu0 %v319
    %v341 = vpop.f32.mrf.mxu0
    %v342 = vadd.f32 0.0, %v341
    %343 = vdwg.mxu0
    %v345 = vsel %vm108, %v268, 0
    %v348 = vsel %vm108, %v271, 0
    %350 = vmatpush.msra.mxu0 0.0
    %351 = vmatpush.msra.mxu0 0.0
    %352 = vmatpush.msra.mxu0 0.0
    %353 = vmatpush.msra.mxu0 0.0
    %354 = vmatpush.msra.mxu0 0.0
    %355 = vmatpush.msra.mxu0 0.0
    %356 = vmatpush.msra.mxu0 0.0
    %357 = vmatpush.msra.mxu0 0.0
    %358 = vmatpush.msra.mxu0 0.0
    %359 = vmatpush.msra.mxu0 0.0
    %360 = vmatpush.msra.mxu0 0.0
    %361 = vmatpush.msra.mxu0 0.0
    %362 = vmatpush.msra.mxu0 %v285
    %363 = vmatpush.msra.mxu0 %v284
    %364 = vmatpush.msra.mxu0 %v283
    %365 = vmatpush.msra.mxu0 %v282
    %366 = vmatmul.f32.gmra.mxu0 %v345
    %v367 = vpop.f32.mrf.mxu0
    %v368 = vadd.f32 0.0, %v367
    %369 = vmatmul.f32.gmra.mxu0 %v348
    %v370 = vpop.f32.mrf.mxu0
    %v371 = vadd.f32 0.0, %v370
    %372 = vdwg.mxu0
    %v373 = vadd.f32 %v310, %v339
    %v374 = vadd.f32 %v313, %v342
    %v375 = vadd.f32 %v373, %v368
    %v376 = vadd.f32 %v374, %v371
    %v377 = vxor.u32 %v375, 2147483648
    %v378 = vxor.u32 %v376, 2147483648
    %v379 = vmul.f32 %v377, 1.442695
    %v380 = vpow.pop %v379
    %v381 = vmul.f32 %v378, 1.442695
    %v382 = vpow.pop %v381
    %v383 = vadd.f32 %v380, 1.0
    %v384 = vadd.f32 %v382, 1.0
    %v385 = vrcp.pop %v383
    %v386 = vmul.f32 %v383, %v385
    %v387 = vsub.f32 1.0, %v386
    %v388 = vmul.f32 %v385, %v387
    %v389 = vadd.f32 %v385, %v388
    %vm390 = vweird.f32 %v383
    %vm391 = vweird.f32 %v385
    %vm392 = vmor %vm390, %vm391
    %v393 = vsel %vm392, %v385, %v389
    %v394 = vand.u32 2147483647, %v383
    %vm395 = vcmp.eq.f32.partialorder %v394, 8.507059e+37
    %v396 = vand.u32 %v383, 2147483648
    %v397 = vor.u32 1.1754944e-38, %v396
    %v398 = vsel %vm395, %v397, %v393
    %v399 = vmul.f32 1.0, %v398
    %v400 = vrcp.pop %v384
    %v401 = vmul.f32 %v384, %v400
    %v402 = vsub.f32 1.0, %v401
    %v403 = vmul.f32 %v400, %v402
    %v404 = vadd.f32 %v400, %v403
    %vm405 = vweird.f32 %v384
    %vm406 = vweird.f32 %v400
    %vm407 = vmor %vm405, %vm406
    %v408 = vsel %vm407, %v400, %v404
    %v409 = vand.u32 2147483647, %v384
    %vm410 = vcmp.eq.f32.partialorder %v409, 8.507059e+37
    %v411 = vand.u32 %v384, 2147483648
    %v412 = vor.u32 1.1754944e-38, %v411
    %v413 = vsel %vm410, %v412, %v408
    %v414 = vmul.f32 1.0, %v413
    %v415 = vld [vmem:[%s3] sm:$0x1]
    %v417 = vperm.slane %v415, 0
    %v419 = vmul.f32 %v399, %v417
    %v420 = vmul.f32 %v414, %v417
    %s421 = scalar_lea.vmem %s3, 1
    %v422 = vld [vmem:[%s421] sm:$0x1]
    %v424 = vperm.slane %v422, 0
    %v426 = vmul.f32 %v399, %v424
    %v427 = vmul.f32 %v414, %v424
    %s428 = scalar_lea.vmem %s3, 2
    %v429 = vld [vmem:[%s428] sm:$0x1]
    %v431 = vperm.slane %v429, 0
    %v433 = vmul.f32 %v399, %v431
    %v434 = vmul.f32 %v414, %v431
    %v436 = vsel %vm108, %v419, 0
    %v439 = vsel %vm108, %v420, 0
    %v442 = vsel %vm108, %v426, 0
    %v445 = vsel %vm108, %v427, 0
    %v448 = vsel %vm108, %v433, 0
    %v451 = vsel %vm108, %v434, 0
    %v454 = vsel %vm108, %v399, 0
    %v457 = vsel %vm108, %v414, 0
    %v460 = vsel %vm108, 0.0, 0
    %462 = vmatpush.xpose.msra.mxu0 %v460
    %463 = vmatpush.xpose.msra.mxu0 %v460
    %464 = vmatpush.xpose.msra.mxu0 %v460
    %465 = vmatpush.xpose.msra.mxu0 %v460
    %466 = vmatpush.xpose.msra.mxu0 %v460
    %467 = vmatpush.xpose.msra.mxu0 %v460
    %468 = vmatpush.xpose.msra.mxu0 %v460
    %469 = vmatpush.xpose.msra.mxu0 %v460
    %470 = vmatpush.xpose.msra.mxu0 %v460
    %471 = vmatpush.xpose.msra.mxu0 %v460
    %472 = vmatpush.xpose.msra.mxu0 %v460
    %473 = vmatpush.xpose.msra.mxu0 %v460
    %474 = vmatpush.xpose.msra.mxu0 %v460
    %475 = vmatpush.xpose.msra.mxu0 %v460
    %476 = vmatpush.xpose.msra.mxu0 %v457
    %477 = vmatpush.xpose.msra.mxu0 %v454
    %478 = vmatmul.f32.gmra.mxu0 %v436
    %v479 = vpop.f32.mrf.mxu0
    %v480 = vadd.f32 0.0, %v479
    %481 = vmatmul.f32.gmra.mxu0 %v439
    %v482 = vpop.f32.mrf.mxu0
    %v483 = vadd.f32 0.0, %v482
    %484 = vmatmul.f32.gmra.mxu0 %v442
    %v485 = vpop.f32.mrf.mxu0
    %v486 = vadd.f32 0.0, %v485
    %487 = vmatmul.f32.gmra.mxu0 %v445
    %v488 = vpop.f32.mrf.mxu0
    %v489 = vadd.f32 0.0, %v488
    %490 = vmatmul.f32.gmra.mxu0 %v448
    %v491 = vpop.f32.mrf.mxu0
    %v492 = vadd.f32 0.0, %v491
    %493 = vmatmul.f32.gmra.mxu0 %v451
    %v494 = vpop.f32.mrf.mxu0
    %v495 = vadd.f32 0.0, %v494
    %496 = vdwg.mxu0
    %497 = vst [vmem:[#allocation5] sm:$0xff] %v480
    %498 = vst [vmem:[#allocation5 + $0x8] sm:$0xff] %v483
    %499 = vst [vmem:[#allocation5 + $0x10] sm:$0xff] %v486
    %500 = vst [vmem:[#allocation5 + $0x18] sm:$0xff] %v489
    %501 = vst [vmem:[#allocation5 + $0x20] sm:$0xff] %v492
    %502 = vst [vmem:[#allocation5 + $0x28] sm:$0xff] %v495
    // Predicated region
    $region22: #{tpu_custom_call.1} parent=1 // pred_check
      _
    $region23: #{tpu_custom_call.1} parent=1 // pred_check_branch
      %504 = sbr.rel (0) target = $region25
    $region24: #{tpu_custom_call.1} parent=1 // pred_region
      %506 = vsyncadd [#allocation4], 0
      %s507 = sshll.u32 [#allocation5], 4
      %s508 = int_to_ptr.vmem [resolvable:$true] %s507
      %s509 = sshll.u32 %s4, 4
      %s510 = int_to_ptr.hbm [resolvable:$true] %s509
      %515 = dma.vmem_to_hbm [thread:$0]  %s508, 768, %s510, [#allocation4], 128, 128, 8
    $region25: #{tpu_custom_call.1} parent=1 // pred_fallthru
      _
    // Predicated region
    $region26: #{tpu_custom_call.1} parent=1 // pred_check
      _
    $region27: #{tpu_custom_call.1} parent=1 // pred_check_branch
      %517 = sbr.rel (0) target = $region29
    $region28: #{tpu_custom_call.1} parent=1 // pred_region
      %519 = dma.done [#allocation4], 768
    $region29: #{tpu_custom_call.1} parent=1 // pred_fallthru
      _
    %520 = vsyncpa [#allocation3], 1
    %521 = vsyncpa [#allocation4], 1

</llo_original>
